<compile_context>
chip_gen: v7x
topology: tpu7x:2x2x1
jax: 0.10.0
libtpu: 0.0.40
codegen_flags: <defaults>
</compile_context>

<pallas_src>
import functools

import jax
import jax.numpy as jnp
from jax.experimental import pallas as pl
from jax.experimental.pallas import tpu as pltpu

LANE = 128                 # TPU lane width -> lane-dense output columns
SUBLANE = 8                # f32 sublane granularity for the batch (row) axis
MAX_SINGLE_TILE_M = 2048   # up to this many rows: one grid step, <=7 padded rows
DEFAULT_TILE_M = 1024      # row tile for genuinely large batches
USE_CORE_PARALLEL = False  # flip on v7x for large multi-tile batches


def _round_up(n, m):
    return (n + m - 1) // m * m


def _cdiv(a, b):
    return (a + b - 1) // b


def _choose_tiling(batch, tile_m):
    """Pick (tile_m, padded_batch) minimising dead rows."""
    rows = _round_up(max(batch, 1), SUBLANE)
    if tile_m is not None:                       # explicit override (tests / tuning)
        tile_m = _round_up(tile_m, SUBLANE)
        return tile_m, _round_up(rows, tile_m)
    if rows <= MAX_SINGLE_TILE_M:                # single grid step, minimal padding
        return rows, rows
    steps = _cdiv(rows, DEFAULT_TILE_M)          # multi-step: minimise B_pad - B
    tile = _round_up(_cdiv(rows, steps), SUBLANE)
    return tile, steps * tile


def _policy_kernel(x_ref, w1_ref, b1_ref, w2_ref, b2_ref, w3_ref, b3_ref, o_ref):
    # All operands f32; MXU matmuls accumulate in f32.  Padded output columns
    # are zero weights/bias -> tanh(0)=0, sliced away in the wrapper.
    h = jnp.dot(x_ref[...], w1_ref[...], preferred_element_type=jnp.float32)
    h = jnp.maximum(h + b1_ref[...], 0.0)
    h = jnp.dot(h, w2_ref[...], preferred_element_type=jnp.float32)
    h = jnp.maximum(h + b2_ref[...], 0.0)
    h = jnp.dot(h, w3_ref[...], preferred_element_type=jnp.float32)
    o_ref[...] = jnp.tanh(h + b3_ref[...]).astype(o_ref.dtype)


@functools.partial(jax.jit, static_argnames=("tile_m",))
def policy_forward(x, w1, b1, w2, b2, w3, b3, *, tile_m=None):
    """x: (B, num_inputs) f32; weights (in, out); biases (1, out).
    Returns (B, num_actions) f32, matching the PyTorch forward."""
    B, num_inputs = x.shape
    num_actions = w3.shape[1]
    x = x.astype(jnp.float32)

    tile_m, B_pad = _choose_tiling(B, tile_m)
    n_steps = B_pad // tile_m

    # Batch pad + last-layer lane pad happen inside this jit -> fused, cheap.
    x_pad = jnp.pad(x, ((0, B_pad - B), (0, 0)))
    n_out_pad = _round_up(num_actions, LANE)
    w3p = jnp.pad(w3.astype(jnp.float32), ((0, 0), (0, n_out_pad - num_actions)))
    b3p = jnp.pad(b3.astype(jnp.float32), ((0, 0), (0, n_out_pad - num_actions)))

    # Weights/biases: constant index_map -> fetched once, resident in VMEM.
    resident = lambda a: pl.BlockSpec(a.shape, lambda i: (0, 0))
    in_specs = [
        pl.BlockSpec((tile_m, num_inputs), lambda i: (i, 0)),  # x tile streams over batch
        resident(w1), resident(b1),
        resident(w2), resident(b2),
        resident(w3p), resident(b3p),
    ]
    out_spec = pl.BlockSpec((tile_m, n_out_pad), lambda i: (i, 0))

    # Note: plain "parallel" does not shard the grid across v7x's two
    # TensorCores; CORE_PARALLEL does (only useful with a multi-step grid).
    if USE_CORE_PARALLEL and n_steps > 1:
        semantics = (pltpu.CORE_PARALLEL,)
    else:
        semantics = ("parallel",)

    out_pad = pl.pallas_call(
        _policy_kernel,
        out_shape=jax.ShapeDtypeStruct((B_pad, n_out_pad), jnp.float32),
        grid=(n_steps,),
        in_specs=in_specs,
        out_specs=out_spec,
        compiler_params=pltpu.CompilerParams(
            dimension_semantics=semantics,
            vmem_limit_bytes=32 * 1024 * 1024,  # explicit (v5e default is 16 MiB)
        ),
    )(x_pad,
      w1.astype(jnp.float32), b1.astype(jnp.float32),
      w2.astype(jnp.float32), b2.astype(jnp.float32),
      w3p, b3p)

    # Slice fuses inside the same jit (no extra dispatch / copy kernel).
    return out_pad[:B, :num_actions]


def init_policy_params(key, num_inputs, num_actions, hidden_size, init_w=0.003):
    """nn.Linear-default init + uniform(-init_w, init_w) override on the last
    layer.  Weights returned already transposed to (in, out)."""
    k1, k2, k3, k4, k5, k6 = jax.random.split(key, 6)

    def linear_init(kw, kb, fan_in, fan_out):
        bound = 1.0 / jnp.sqrt(fan_in)
        w = jax.random.uniform(kw, (fan_in, fan_out), jnp.float32, -bound, bound)
        b = jax.random.uniform(kb, (1, fan_out), jnp.float32, -bound, bound)
        return w, b

    w1, b1 = linear_init(k1, k2, num_inputs, hidden_size)
    w2, b2 = linear_init(k3, k4, hidden_size, hidden_size)
    w3 = jax.random.uniform(k5, (hidden_size, num_actions), jnp.float32, -init_w, init_w)
    b3 = jax.random.uniform(k6, (1, num_actions), jnp.float32, -init_w, init_w)
    return w1, b1, w2, b2, w3, b3


def _reference(x, w1, b1, w2, b2, w3, b3):
    """Plain-JAX f32 reference (highest matmul precision) == PyTorch math."""
    h = jnp.maximum(jnp.dot(x, w1, precision="highest") + b1, 0.0)
    h = jnp.maximum(jnp.dot(h, w2, precision="highest") + b2, 0.0)
    return jnp.tanh(jnp.dot(h, w3, precision="highest") + b3)


if __name__ == "__main__":
    # DDPG actor shapes: state dim 4, hidden 32, 2 actions.
    num_inputs, num_actions, hidden_size = 4, 2, 32

    key = jax.random.PRNGKey(0)
    kx1, kx2, kp = jax.random.split(key, 3)
    params = init_policy_params(kp, num_inputs, num_actions, hidden_size)

    # Case 1: acting-time batch (B=2) -> one 8-row tile, grid of 1.
    x_small = jax.random.normal(kx1, (2, num_inputs), jnp.float32)
    out_small = jax.block_until_ready(policy_forward(x_small, *params))
    assert out_small.shape == (2, num_actions)

    # Case 2: replay-buffer batch (B=300) -> one 304-row tile, grid of 1
    # (previously padded to 512 rows across two tiles => 212 dead rows).
    x_big = jax.random.normal(kx2, (300, num_inputs), jnp.float32)
    out_big = jax.block_until_ready(policy_forward(x_big, *params))
    assert out_big.shape == (300, num_actions)

    # Case 3: force a multi-step grid (tile_m=128 -> 3 steps) to exercise the
    # streaming-batch / resident-weights pipeline path.
    out_grid = jax.block_until_ready(policy_forward(x_big, *params, tile_m=128))
    assert out_grid.shape == (300, num_actions)
    assert jnp.allclose(out_big, out_grid, atol=1e-6, rtol=1e-6)

    # Check against the f32 PyTorch-equivalent math.
    for x_in, out in ((x_small, out_small), (x_big, out_big), (x_big, out_grid)):
        ref = _reference(x_in, *params)
        assert jnp.allclose(out, ref, atol=2e-3, rtol=2e-3), float(
            jnp.max(jnp.abs(out - ref)))

    print("KERNEL_OK")
</pallas_src>

<mosaic_0001>
module attributes {stable_mosaic.version = 11 : i64} {
  func.func @_policy_kernel(%arg0: i32, %arg1: memref<8x4xf32, #tpu.memory_space<vmem>>, %arg2: memref<4x32xf32, #tpu.memory_space<vmem>>, %arg3: memref<1x32xf32, #tpu.memory_space<vmem>>, %arg4: memref<32x32xf32, #tpu.memory_space<vmem>>, %arg5: memref<1x32xf32, #tpu.memory_space<vmem>>, %arg6: memref<32x128xf32, #tpu.memory_space<vmem>>, %arg7: memref<1x128xf32, #tpu.memory_space<vmem>>, %arg8: memref<8x128xf32, #tpu.memory_space<vmem>>) attributes {dimension_semantics = [#tpu.dimension_semantics<parallel>], iteration_bounds = array<i64: 1>, scalar_prefetch = 0 : i64, scratch_operands = 0 : i64, tpu.core_type = #tpu.core_type<tc>, window_params = [{transform_indices = @transform_0, window_bounds = array<i64: 8, 4>}, {pipeline_mode = #tpu.pipeline_mode<synchronous>, transform_indices = @transform_1, window_bounds = array<i64: 4, 32>}, {pipeline_mode = #tpu.pipeline_mode<synchronous>, transform_indices = @transform_2, window_bounds = array<i64: 1, 32>}, {pipeline_mode = #tpu.pipeline_mode<synchronous>, transform_indices = @transform_3, window_bounds = array<i64: 32, 32>}, {pipeline_mode = #tpu.pipeline_mode<synchronous>, transform_indices = @transform_4, window_bounds = array<i64: 1, 32>}, {pipeline_mode = #tpu.pipeline_mode<synchronous>, transform_indices = @transform_5, window_bounds = array<i64: 32, 128>}, {pipeline_mode = #tpu.pipeline_mode<synchronous>, transform_indices = @transform_6, window_bounds = array<i64: 1, 128>}, {transform_indices = @transform_7, window_bounds = array<i64: 8, 128>}]} {
    %c0 = arith.constant 0 : index
    %c0_0 = arith.constant 0 : index
    %0 = vector.load %arg1[%c0, %c0_0] : memref<8x4xf32, #tpu.memory_space<vmem>>, vector<8x4xf32>
    %c0_1 = arith.constant 0 : index
    %c0_2 = arith.constant 0 : index
    %1 = vector.load %arg2[%c0_1, %c0_2] : memref<4x32xf32, #tpu.memory_space<vmem>>, vector<4x32xf32>
    %cst = arith.constant dense<0.000000e+00> : vector<8x32xf32>
    %2 = tpu.matmul %0, %1, %cst {dimension_numbers = #tpu.dot_dimension_numbers<[1], [0], [0], [1], [0, 0, 1, 1], [], []>} : vector<8x4xf32>, vector<4x32xf32>, vector<8x32xf32> -> vector<8x32xf32>
    %c0_3 = arith.constant 0 : index
    %c0_4 = arith.constant 0 : index
    %3 = vector.load %arg3[%c0_3, %c0_4] : memref<1x32xf32, #tpu.memory_space<vmem>>, vector<1x32xf32>
    %4 = vector.broadcast %3 : vector<1x32xf32> to vector<8x32xf32>
    %5 = arith.addf %2, %4 : vector<8x32xf32>
    %cst_5 = arith.constant 0.000000e+00 : f32
    %6 = vector.broadcast %cst_5 : f32 to vector<8x32xf32>
    %7 = arith.maximumf %5, %6 : vector<8x32xf32>
    %c0_6 = arith.constant 0 : index
    %c0_7 = arith.constant 0 : index
    %8 = vector.load %arg4[%c0_6, %c0_7] : memref<32x32xf32, #tpu.memory_space<vmem>>, vector<32x32xf32>
    %cst_8 = arith.constant dense<0.000000e+00> : vector<8x32xf32>
    %9 = tpu.matmul %7, %8, %cst_8 {dimension_numbers = #tpu.dot_dimension_numbers<[1], [0], [0], [1], [0, 0, 1, 1], [], []>} : vector<8x32xf32>, vector<32x32xf32>, vector<8x32xf32> -> vector<8x32xf32>
    %c0_9 = arith.constant 0 : index
    %c0_10 = arith.constant 0 : index
    %10 = vector.load %arg5[%c0_9, %c0_10] : memref<1x32xf32, #tpu.memory_space<vmem>>, vector<1x32xf32>
    %11 = vector.broadcast %10 : vector<1x32xf32> to vector<8x32xf32>
    %12 = arith.addf %9, %11 : vector<8x32xf32>
    %cst_11 = arith.constant 0.000000e+00 : f32
    %13 = vector.broadcast %cst_11 : f32 to vector<8x32xf32>
    %14 = arith.maximumf %12, %13 : vector<8x32xf32>
    %c0_12 = arith.constant 0 : index
    %c0_13 = arith.constant 0 : index
    %15 = vector.load %arg6[%c0_12, %c0_13] : memref<32x128xf32, #tpu.memory_space<vmem>>, vector<32x128xf32>
    %cst_14 = arith.constant dense<0.000000e+00> : vector<8x128xf32>
    %16 = tpu.matmul %14, %15, %cst_14 {dimension_numbers = #tpu.dot_dimension_numbers<[1], [0], [0], [1], [0, 0, 1, 1], [], []>} : vector<8x32xf32>, vector<32x128xf32>, vector<8x128xf32> -> vector<8x128xf32>
    %c0_15 = arith.constant 0 : index
    %c0_16 = arith.constant 0 : index
    %17 = vector.load %arg7[%c0_15, %c0_16] : memref<1x128xf32, #tpu.memory_space<vmem>>, vector<1x128xf32>
    %18 = vector.broadcast %17 : vector<1x128xf32> to vector<8x128xf32>
    %19 = arith.addf %16, %18 : vector<8x128xf32>
    %20 = math.tanh %19 : vector<8x128xf32>
    %c0_17 = arith.constant 0 : index
    %c0_18 = arith.constant 0 : index
    %21 = vector.load %arg8[%c0_17, %c0_18] : memref<8x128xf32, #tpu.memory_space<vmem>>, vector<8x128xf32>
    tpu.vector_store %arg8[%c0_17, %c0_18], %20 {strides = array<i32>} : memref<8x128xf32, #tpu.memory_space<vmem>>, vector<8x128xf32>,
    return
  }
  func.func @transform_0(%arg0: i32) -> (i32, i32) {
    %c0_i32 = arith.constant 0 : i32
    %c0_i32_0 = arith.constant 0 : i32
    return %arg0, %c0_i32 : i32, i32
  }
  func.func @transform_1(%arg0: i32) -> (i32, i32) {
    %c0_i32 = arith.constant 0 : i32
    %c0_i32_0 = arith.constant 0 : i32
    %c0_i32_1 = arith.constant 0 : i32
    return %c0_i32, %c0_i32_0 : i32, i32
  }
  func.func @transform_2(%arg0: i32) -> (i32, i32) {
    %c0_i32 = arith.constant 0 : i32
    %c0_i32_0 = arith.constant 0 : i32
    %c0_i32_1 = arith.constant 0 : i32
    return %c0_i32, %c0_i32_0 : i32, i32
  }
  func.func @transform_3(%arg0: i32) -> (i32, i32) {
    %c0_i32 = arith.constant 0 : i32
    %c0_i32_0 = arith.constant 0 : i32
    %c0_i32_1 = arith.constant 0 : i32
    return %c0_i32, %c0_i32_0 : i32, i32
  }
  func.func @transform_4(%arg0: i32) -> (i32, i32) {
    %c0_i32 = arith.constant 0 : i32
    %c0_i32_0 = arith.constant 0 : i32
    %c0_i32_1 = arith.constant 0 : i32
    return %c0_i32, %c0_i32_0 : i32, i32
  }
  func.func @transform_5(%arg0: i32) -> (i32, i32) {
    %c0_i32 = arith.constant 0 : i32
    %c0_i32_0 = arith.constant 0 : i32
    %c0_i32_1 = arith.constant 0 : i32
    return %c0_i32, %c0_i32_0 : i32, i32
  }
  func.func @transform_6(%arg0: i32) -> (i32, i32) {
    %c0_i32 = arith.constant 0 : i32
    %c0_i32_0 = arith.constant 0 : i32
    %c0_i32_1 = arith.constant 0 : i32
    return %c0_i32, %c0_i32_0 : i32, i32
  }
  func.func @transform_7(%arg0: i32) -> (i32, i32) {
    %c0_i32 = arith.constant 0 : i32
    %c0_i32_0 = arith.constant 0 : i32
    return %arg0, %c0_i32 : i32, i32
  }
}

</mosaic_0001>

<llo_original>
// kernel: policy_forward.1
$region0: #{policy_forward.1}
  #allocation0 [shape = 'u32[]', space=smem, size = 0x4, offset = 0x4, fixed_abs, tag = 'smem constant byte address 0x4 - core index']
  #allocation1 [shape = 'u32[144,128]{1,0:T(1,128)}', space=vmem, size = 0x12000, scoped, tag = 'internal scratch']
  %s0 = inlined_call_operand.vmem [shape: f32[8,4], index: 0, kind: input, shape index: {}]
  %s1 = inlined_call_operand.vmem [shape: f32[4,32], index: 1, kind: input, shape index: {}]
  %s2 = inlined_call_operand.vmem [shape: f32[1,32], index: 2, kind: input, shape index: {}]
  %s3 = inlined_call_operand.vmem [shape: f32[32,32], index: 3, kind: input, shape index: {}]
  %s4 = inlined_call_operand.vmem [shape: f32[1,32], index: 4, kind: input, shape index: {}]
  %s5 = inlined_call_operand.vmem [shape: f32[32,128], index: 5, kind: input, shape index: {}]
  %s6 = inlined_call_operand.vmem [shape: f32[1,128], index: 6, kind: input, shape index: {}]
  %s7 = inlined_call_operand.vmem [shape: f32[8,128], index: 7, kind: output, shape index: {}]
  %s8 = sld [smem:[#allocation0]]
  $region38: #{policy_forward.1} parent=0
    _
  %s10 = ssub.s32 1, %s8
  %s11 = scalar_select 0, %s10, %s8
  // Predicated region
  $region2: #{policy_forward.1} parent=0 // pred_check
    _
  $region3: #{policy_forward.1} parent=0 // pred_check_branch
    %13 = sbr.rel (0) target = $region5
  $region4: #{policy_forward.1} parent=0 // pred_region
    _
  $region5: #{policy_forward.1} parent=0 // pred_fallthru
    _
  // Predicated region
  $region6: #{policy_forward.1} parent=0 // pred_check
    _
  $region7: #{policy_forward.1} parent=0 // pred_check_branch
    %15 = sbr.rel (0) target = $region9
  $region8: #{policy_forward.1} parent=0 // pred_region
    _
  $region9: #{policy_forward.1} parent=0 // pred_fallthru
    _
  // Predicated region
  $region10: #{policy_forward.1} parent=0 // pred_check
    _
  $region11: #{policy_forward.1} parent=0 // pred_check_branch
    %17 = sbr.rel (0) target = $region13
  $region12: #{policy_forward.1} parent=0 // pred_region
    _
  $region13: #{policy_forward.1} parent=0 // pred_fallthru
    _
  // Predicated region
  $region14: #{policy_forward.1} parent=0 // pred_check
    _
  $region15: #{policy_forward.1} parent=0 // pred_check_branch
    %19 = sbr.rel (0) target = $region17
  $region16: #{policy_forward.1} parent=0 // pred_region
    _
  $region17: #{policy_forward.1} parent=0 // pred_fallthru
    _
  // Predicated region
  $region18: #{policy_forward.1} parent=0 // pred_check
    _
  $region19: #{policy_forward.1} parent=0 // pred_check_branch
    %21 = sbr.rel (0) target = $region21
  $region20: #{policy_forward.1} parent=0 // pred_region
    _
  $region21: #{policy_forward.1} parent=0 // pred_fallthru
    _
  // Predicated region
  $region22: #{policy_forward.1} parent=0 // pred_check
    _
  $region23: #{policy_forward.1} parent=0 // pred_check_branch
    %23 = sbr.rel (0) target = $region25
  $region24: #{policy_forward.1} parent=0 // pred_region
    _
  $region25: #{policy_forward.1} parent=0 // pred_fallthru
    _
  // Predicated region
  $region26: #{policy_forward.1} parent=0 // pred_check
    _
  $region27: #{policy_forward.1} parent=0 // pred_check_branch
    %25 = sbr.rel (0) target = $region29
  $region28: #{policy_forward.1} parent=0 // pred_region
    _
  $region29: #{policy_forward.1} parent=0 // pred_fallthru
    _
  %v26 = vld [vmem:[%s0] sm:$0xff]
  %v27 = vld [vmem:[%s1] sm:$0xf]
  %v28 = vld [vmem:[%s2] sm:$0x1]
  %v30 = vlaneseq
  %v31 = vshrl.u32 %v30, 7
  %v32 = vsub.s32 0, %v31
  %v33 = vrot.slane %v28, %v32
  %vm35 = vcmask 31744
  %v37 = vsel %vm35, %v26, 0
  %vm39 = vcmask 1043456
  %v41 = vsel %vm39, %v27, 0
  %43 = vmatprep.subr.mxu0 0.0
  %44 = vmatpush1.msra.mxu0 %v41
  %45 = vmatprep.subr.mxu0 0.0
  %46 = vmatpush1.msra.mxu0 0.0
  %47 = vmatprep.subr.mxu0 0.0
  %48 = vmatpush1.msra.mxu0 0.0
  %49 = vmatprep.subr.mxu0 0.0
  %50 = vmatpush1.msra.mxu0 0.0
  %51 = vmatprep.subr.mxu0 0.0
  %52 = vmatpush1.msra.mxu0 0.0
  %53 = vmatprep.subr.mxu0 0.0
  %54 = vmatpush1.msra.mxu0 0.0
  %55 = vmatprep.subr.mxu0 0.0
  %56 = vmatpush1.msra.mxu0 0.0
  %57 = vmatprep.subr.mxu0 0.0
  %58 = vmatpush1.msra.mxu0 0.0
  %59 = vmatprep.subr.mxu0 0.0
  %60 = vmatpush1.msra.mxu0 0.0
  %61 = vmatprep.subr.mxu0 0.0
  %62 = vmatpush1.msra.mxu0 0.0
  %63 = vmatprep.subr.mxu0 0.0
  %64 = vmatpush1.msra.mxu0 0.0
  %65 = vmatprep.subr.mxu0 0.0
  %66 = vmatpush1.msra.mxu0 0.0
  %67 = vmatprep.subr.mxu0 0.0
  %68 = vmatpush1.msra.mxu0 0.0
  %69 = vmatprep.subr.mxu0 0.0
  %70 = vmatpush1.msra.mxu0 0.0
  %71 = vmatprep.subr.mxu0 0.0
  %72 = vmatpush1.msra.mxu0 0.0
  %73 = vmatprep.subr.mxu0 0.0
  %74 = vmatpush1.msra.mxu0 0.0
  %75 = vmatprep.subr.mxu0 0.0
  %76 = vmatpush1.msra.mxu0 0.0
  %77 = vmatprep.subr.mxu0 0.0
  %78 = vmatpush1.msra.mxu0 0.0
  %79 = vmatprep.subr.mxu0 0.0
  %80 = vmatpush1.msra.mxu0 0.0
  %81 = vmatprep.subr.mxu0 0.0
  %82 = vmatpush1.msra.mxu0 0.0
  %83 = vmatprep.subr.mxu0 0.0
  %84 = vmatpush1.msra.mxu0 0.0
  %85 = vmatprep.subr.mxu0 0.0
  %86 = vmatpush1.msra.mxu0 0.0
  %87 = vmatprep.subr.mxu0 0.0
  %88 = vmatpush1.msra.mxu0 0.0
  %89 = vmatprep.subr.mxu0 0.0
  %90 = vmatpush1.msra.mxu0 0.0
  %91 = vmatprep.subr.mxu0 0.0
  %92 = vmatpush1.msra.mxu0 0.0
  %93 = vmatprep.subr.mxu0 0.0
  %94 = vmatpush1.msra.mxu0 0.0
  %95 = vmatprep.subr.mxu0 0.0
  %96 = vmatpush1.msra.mxu0 0.0
  %97 = vmatprep.subr.mxu0 0.0
  %98 = vmatpush1.msra.mxu0 0.0
  %99 = vmatprep.subr.mxu0 0.0
  %100 = vmatpush1.msra.mxu0 0.0
  %101 = vmatprep.subr.mxu0 0.0
  %102 = vmatpush1.msra.mxu0 0.0
  %103 = vmatprep.subr.mxu0 0.0
  %104 = vmatpush1.msra.mxu0 0.0
  %105 = vmatprep.subr.mxu0 0.0
  %106 = vmatpush1.msra.mxu0 0.0
  %107 = vmatprep.mubr.f32.mxu0 0.0
  %108 = vmatmul.mubr.f32.gmra.mrb[0].mxu0 %v37
  %v109 = vpop.f32.mrb[0].mxu0
  %v110 = vadd.f32 %v33, %v109
  %v111 = vpop.f32.mrb[0].mxu0
  %112 = vdwg.mxu0
  %v113 = vmax.f32 %v110, 0.0
  %v114 = vld [vmem:[%s3] sm:$0xff]
  %v115 = vld [vmem:[%s3 + $0x8] sm:$0xff]
  %v116 = vld [vmem:[%s3 + $0x10] sm:$0xff]
  %v117 = vld [vmem:[%s3 + $0x18] sm:$0xff]
  %v118 = vld [vmem:[%s4] sm:$0x1]
  %v120 = vlaneseq
  %v121 = vshrl.u32 %v120, 7
  %v122 = vsub.s32 0, %v121
  %v123 = vrot.slane %v118, %v122
  %vm125 = vcmask 261120
  %v127 = vsel %vm125, %v113, 0
  %129 = vmatprep.subr.mxu0 0.0
  %130 = vmatpush1.msra.mxu0 %v114
  %131 = vmatprep.subr.mxu0 0.0
  %132 = vmatpush1.msra.mxu0 %v115
  %133 = vmatprep.subr.mxu0 0.0
  %134 = vmatpush1.msra.mxu0 %v116
  %135 = vmatprep.subr.mxu0 0.0
  %136 = vmatpush1.msra.mxu0 %v117
  %137 = vmatprep.subr.mxu0 0.0
  %138 = vmatpush1.msra.mxu0 0.0
  %139 = vmatprep.subr.mxu0 0.0
  %140 = vmatpush1.msra.mxu0 0.0
  %141 = vmatprep.subr.mxu0 0.0
  %142 = vmatpush1.msra.mxu0 0.0
  %143 = vmatprep.subr.mxu0 0.0
  %144 = vmatpush1.msra.mxu0 0.0
  %145 = vmatprep.subr.mxu0 0.0
  %146 = vmatpush1.msra.mxu0 0.0
  %147 = vmatprep.subr.mxu0 0.0
  %148 = vmatpush1.msra.mxu0 0.0
  %149 = vmatprep.subr.mxu0 0.0
  %150 = vmatpush1.msra.mxu0 0.0
  %151 = vmatprep.subr.mxu0 0.0
  %152 = vmatpush1.msra.mxu0 0.0
  %153 = vmatprep.subr.mxu0 0.0
  %154 = vmatpush1.msra.mxu0 0.0
  %155 = vmatprep.subr.mxu0 0.0
  %156 = vmatpush1.msra.mxu0 0.0
  %157 = vmatprep.subr.mxu0 0.0
  %158 = vmatpush1.msra.mxu0 0.0
  %159 = vmatprep.subr.mxu0 0.0
  %160 = vmatpush1.msra.mxu0 0.0
  %161 = vmatprep.subr.mxu0 0.0
  %162 = vmatpush1.msra.mxu0 0.0
  %163 = vmatprep.subr.mxu0 0.0
  %164 = vmatpush1.msra.mxu0 0.0
  %165 = vmatprep.subr.mxu0 0.0
  %166 = vmatpush1.msra.mxu0 0.0
  %167 = vmatprep.subr.mxu0 0.0
  %168 = vmatpush1.msra.mxu0 0.0
  %169 = vmatprep.subr.mxu0 0.0
  %170 = vmatpush1.msra.mxu0 0.0
  %171 = vmatprep.subr.mxu0 0.0
  %172 = vmatpush1.msra.mxu0 0.0
  %173 = vmatprep.subr.mxu0 0.0
  %174 = vmatpush1.msra.mxu0 0.0
  %175 = vmatprep.subr.mxu0 0.0
  %176 = vmatpush1.msra.mxu0 0.0
  %177 = vmatprep.subr.mxu0 0.0
  %178 = vmatpush1.msra.mxu0 0.0
  %179 = vmatprep.subr.mxu0 0.0
  %180 = vmatpush1.msra.mxu0 0.0
  %181 = vmatprep.subr.mxu0 0.0
  %182 = vmatpush1.msra.mxu0 0.0
  %183 = vmatprep.subr.mxu0 0.0
  %184 = vmatpush1.msra.mxu0 0.0
  %185 = vmatprep.subr.mxu0 0.0
  %186 = vmatpush1.msra.mxu0 0.0
  %187 = vmatprep.subr.mxu0 0.0
  %188 = vmatpush1.msra.mxu0 0.0
  %189 = vmatprep.subr.mxu0 0.0
  %190 = vmatpush1.msra.mxu0 0.0
  %191 = vmatprep.subr.mxu0 0.0
  %192 = vmatpush1.msra.mxu0 0.0
  %193 = vmatprep.mubr.f32.mxu0 0.0
  %194 = vmatmul.mubr.f32.gmra.mrb[0].mxu0 %v127
  %v195 = vpop.f32.mrb[0].mxu0
  %v196 = vadd.f32 %v123, %v195
  %v197 = vpop.f32.mrb[0].mxu0
  %198 = vdwg.mxu0
  %v199 = vmax.f32 %v196, 0.0
  %v200 = vld [vmem:[%s5] sm:$0xff]
  %v201 = vld [vmem:[%s5 + $0x8] sm:$0xff]
  %v202 = vld [vmem:[%s5 + $0x10] sm:$0xff]
  %v203 = vld [vmem:[%s5 + $0x18] sm:$0xff]
  %v204 = vld [vmem:[%s6] sm:$0x1]
  %v206 = vlaneseq
  %v207 = vshrl.u32 %v206, 7
  %v208 = vsub.s32 0, %v207
  %v209 = vrot.slane %v204, %v208
  %v212 = vsel %vm125, %v199, 0
  %214 = vmatprep.subr.mxu0 0.0
  %215 = vmatpush1.msra.mxu0 %v200
  %216 = vmatprep.subr.mxu0 0.0
  %217 = vmatpush1.msra.mxu0 %v201
  %218 = vmatprep.subr.mxu0 0.0
  %219 = vmatpush1.msra.mxu0 %v202
  %220 = vmatprep.subr.mxu0 0.0
  %221 = vmatpush1.msra.mxu0 %v203
  %222 = vmatprep.subr.mxu0 0.0
  %223 = vmatpush1.msra.mxu0 0.0
  %224 = vmatprep.subr.mxu0 0.0
  %225 = vmatpush1.msra.mxu0 0.0
  %226 = vmatprep.subr.mxu0 0.0
  %227 = vmatpush1.msra.mxu0 0.0
  %228 = vmatprep.subr.mxu0 0.0
  %229 = vmatpush1.msra.mxu0 0.0
  %230 = vmatprep.subr.mxu0 0.0
  %231 = vmatpush1.msra.mxu0 0.0
  %232 = vmatprep.subr.mxu0 0.0
  %233 = vmatpush1.msra.mxu0 0.0
  %234 = vmatprep.subr.mxu0 0.0
  %235 = vmatpush1.msra.mxu0 0.0
  %236 = vmatprep.subr.mxu0 0.0
  %237 = vmatpush1.msra.mxu0 0.0
  %238 = vmatprep.subr.mxu0 0.0
  %239 = vmatpush1.msra.mxu0 0.0
  %240 = vmatprep.subr.mxu0 0.0
  %241 = vmatpush1.msra.mxu0 0.0
  %242 = vmatprep.subr.mxu0 0.0
  %243 = vmatpush1.msra.mxu0 0.0
  %244 = vmatprep.subr.mxu0 0.0
  %245 = vmatpush1.msra.mxu0 0.0
  %246 = vmatprep.subr.mxu0 0.0
  %247 = vmatpush1.msra.mxu0 0.0
  %248 = vmatprep.subr.mxu0 0.0
  %249 = vmatpush1.msra.mxu0 0.0
  %250 = vmatprep.subr.mxu0 0.0
  %251 = vmatpush1.msra.mxu0 0.0
  %252 = vmatprep.subr.mxu0 0.0
  %253 = vmatpush1.msra.mxu0 0.0
  %254 = vmatprep.subr.mxu0 0.0
  %255 = vmatpush1.msra.mxu0 0.0
  %256 = vmatprep.subr.mxu0 0.0
  %257 = vmatpush1.msra.mxu0 0.0
  %258 = vmatprep.subr.mxu0 0.0
  %259 = vmatpush1.msra.mxu0 0.0
  %260 = vmatprep.subr.mxu0 0.0
  %261 = vmatpush1.msra.mxu0 0.0
  %262 = vmatprep.subr.mxu0 0.0
  %263 = vmatpush1.msra.mxu0 0.0
  %264 = vmatprep.subr.mxu0 0.0
  %265 = vmatpush1.msra.mxu0 0.0
  %266 = vmatprep.subr.mxu0 0.0
  %267 = vmatpush1.msra.mxu0 0.0
  %268 = vmatprep.subr.mxu0 0.0
  %269 = vmatpush1.msra.mxu0 0.0
  %270 = vmatprep.subr.mxu0 0.0
  %271 = vmatpush1.msra.mxu0 0.0
  %272 = vmatprep.subr.mxu0 0.0
  %273 = vmatpush1.msra.mxu0 0.0
  %274 = vmatprep.subr.mxu0 0.0
  %275 = vmatpush1.msra.mxu0 0.0
  %276 = vmatprep.subr.mxu0 0.0
  %277 = vmatpush1.msra.mxu0 0.0
  %278 = vmatprep.mubr.f32.mxu0 0.0
  %279 = vmatmul.mubr.f32.gmra.mrb[0].mxu0 %v212
  %v280 = vpop.f32.mrb[0].mxu0
  %v281 = vadd.f32 %v209, %v280
  %v282 = vpop.f32.mrb[0].mxu0
  %283 = vdwg.mxu0
  %v284 = vtanh.pop %v281
  %285 = vst [vmem:[%s7] sm:$0xff] %v284
  // Predicated region
  $region30: #{policy_forward.1} parent=0 // pred_check
    _
  $region31: #{policy_forward.1} parent=0 // pred_check_branch
    %287 = sbr.rel (0) target = $region33
  $region32: #{policy_forward.1} parent=0 // pred_region
    _
  $region33: #{policy_forward.1} parent=0 // pred_fallthru
    _
  // Predicated region
  $region34: #{policy_forward.1} parent=0 // pred_check
    _
  $region35: #{policy_forward.1} parent=0 // pred_check_branch
    %289 = sbr.rel (0) target = $region37
  $region36: #{policy_forward.1} parent=0 // pred_region
    _
  $region37: #{policy_forward.1} parent=0 // pred_fallthru
    _

</llo_original>
